<compile_context>
chip_gen: v6e
topology: v6e:2x2x1
jax: 0.10.0
libtpu: 0.0.40
codegen_flags: <defaults>
</compile_context>

<pallas_src>
import functools

import jax
import jax.numpy as jnp
from jax.experimental import pallas as pl
from jax.experimental.pallas import tpu as pltpu

M_UE = 5
ACT_DIM = M_UE + M_UE          # 10, as in the PyTorch module
STATE_DIM = 22                 # small state dim -> concat dim = 32
HIDDEN = 128
MAX_TILE_B = 8192              # keeps double-buffered tiles inside v7x's 64 MiB VMEM


def _round_up(x, m):
    return ((x + m - 1) // m) * m


def _choose_tile_b(batch, tile_b):
    tb = int(min(tile_b, MAX_TILE_B))
    tb = min(tb, _round_up(batch, 8))
    tb = max(8, _round_up(tb, 8))
    # >= 2 grid steps for big batches so the "parallel" axis feeds both TCs (v7x).
    if batch >= 2048 and pl.cdiv(batch, tb) == 1:
        tb = _round_up(pl.cdiv(batch, 2), 8)
    return tb


def _vmem_limit_bytes(tb):
    # ~2 KiB/row for the two double-buffered f32 input blocks (22/10-wide last dims
    # pad to 128 lanes), ~1 KiB/row for the (tb,1) output block, plus h / cast
    # temporaries and headroom.  Clamp to a value that is legal on v5e/v6e/v7x.
    est = tb * 6 * 1024 + (4 << 20)
    return int(max(16 << 20, min(est, 56 << 20)))


def _critic_kernel(s_ref, a_ref, w1s_ref, w1a_ref, b1_ref, w2_ref, o_ref):
    # s_ref : (tb, S) input dtype     a_ref : (tb, A)
    # w1s_ref: (S, 128) mm_dtype      w1a_ref: (A, 128) mm_dtype
    # b1_ref: (1, 128) f32            w2_ref: (128, 1) mm_dtype
    # o_ref : (tb, 1) f32
    mm_dtype = w1s_ref.dtype
    # In-kernel cast (no HBM bf16 copy of the activations).
    s = s_ref[...].astype(mm_dtype)
    a = a_ref[...].astype(mm_dtype)
    h = jnp.dot(s, w1s_ref[...], preferred_element_type=jnp.float32)
    h = h + jnp.dot(a, w1a_ref[...], preferred_element_type=jnp.float32)
    h = jnp.maximum(h + b1_ref[...], 0.0)          # bias + ReLU in f32 (v5e-safe)
    h = h.astype(mm_dtype)                         # halve h spill traffic, bf16 MXU op
    # Layer 2: MXU-natural orientation, f32 accumulation.
    y = jnp.dot(h, w2_ref[...], preferred_element_type=jnp.float32)   # (tb, 1)
    o_ref[...] = y.astype(o_ref.dtype)


@functools.partial(jax.jit,
                   static_argnames=("tile_b", "matmul_dtype", "xla_fallback_batch"))
def critic_forward(state, act, w1, b1, w2, b2, *, tile_b=4096,
                   matmul_dtype=jnp.bfloat16, xla_fallback_batch=512):
    """state: (B,S), act: (B,A), w1: (S+A,128), b1: (128,), w2: (128,1), b2: (1,)
    -> (B, 1) float32."""
    B, state_dim = state.shape
    act_dim = act.shape[1]

    # Tiny batches: launch overhead dwarfs the work -> let XLA fuse the GEMMs.
    if B < xla_fallback_batch:
        x = jnp.concatenate([state, act], axis=-1)
        h = jnp.maximum(x @ w1 + b1, 0.0)
        return (h @ w2 + b2).astype(jnp.float32)

    # Split / cast the (tiny) weights once in the wrapper; they stay VMEM-resident.
    w1s = w1[:state_dim].astype(matmul_dtype)
    w1a = w1[state_dim:].astype(matmul_dtype)
    b1_row = b1.reshape(1, HIDDEN).astype(jnp.float32)
    w2_col = w2.reshape(HIDDEN, 1).astype(matmul_dtype)

    tb = _choose_tile_b(B, tile_b)
    grid = (pl.cdiv(B, tb),)            # no jnp.pad: last block is partial

    in_bytes = int(jnp.dtype(state.dtype).itemsize)
    cost = pl.CostEstimate(
        flops=2 * B * (state_dim + act_dim) * HIDDEN     # layer 1
              + 2 * B * HIDDEN                            # layer 2
              + 2 * B * HIDDEN,                           # bias + relu
        transcendentals=0,
        bytes_accessed=(B * (state_dim + act_dim) * in_bytes
                        + (state_dim + act_dim + 1) * HIDDEN * 4 + HIDDEN * 4
                        + B * 4),
    )

    out = pl.pallas_call(
        _critic_kernel,
        out_shape=jax.ShapeDtypeStruct((B, 1), jnp.float32),
        grid=grid,
        in_specs=[
            pl.BlockSpec((tb, state_dim), lambda i: (i, 0)),      # streamed per tile
            pl.BlockSpec((tb, act_dim), lambda i: (i, 0)),
            pl.BlockSpec((state_dim, HIDDEN), lambda i: (0, 0)),  # VMEM-resident
            pl.BlockSpec((act_dim, HIDDEN), lambda i: (0, 0)),
            pl.BlockSpec((1, HIDDEN), lambda i: (0, 0)),
            pl.BlockSpec((HIDDEN, 1), lambda i: (0, 0)),
        ],
        out_specs=pl.BlockSpec((tb, 1), lambda i: (i, 0)),
        compiler_params=pltpu.CompilerParams(
            dimension_semantics=("parallel",),
            vmem_limit_bytes=_vmem_limit_bytes(tb)),
        cost_estimate=cost,
    )(state, act, w1s, w1a, b1_row, w2_col)

    # Scalar output bias folded in the wrapper (no (1,1) VMEM tile / DMA stream).
    return out + b2.reshape(1, 1).astype(jnp.float32)


def init_params(key, state_dim, act_dim):
    """Deterministic init mimicking nn.Linear defaults (uniform +/- 1/sqrt(fan_in))."""
    d_in = state_dim + act_dim
    k1, k2, k3, k4 = jax.random.split(key, 4)
    bound1 = 1.0 / jnp.sqrt(d_in)
    w1 = jax.random.uniform(k1, (d_in, HIDDEN), jnp.float32, -bound1, bound1)
    b1 = jax.random.uniform(k2, (HIDDEN,), jnp.float32, -bound1, bound1)
    bound2 = 1.0 / jnp.sqrt(HIDDEN)
    w2 = jax.random.uniform(k3, (HIDDEN, 1), jnp.float32, -bound2, bound2)
    b2 = jax.random.uniform(k4, (1,), jnp.float32, -bound2, bound2)
    return w1, b1, w2, b2


if __name__ == "__main__":
    key = jax.random.PRNGKey(0)
    k_s, k_a, k_p = jax.random.split(key, 3)

    B = 8
    state = jax.random.normal(k_s, (B, STATE_DIM), jnp.float32)
    act = jax.random.normal(k_a, (B, ACT_DIM), jnp.float32)
    w1, b1, w2, b2 = init_params(k_p, STATE_DIM, ACT_DIM)

    # Pure-JAX reference (same math as the PyTorch forward).
    def ref_fn(s, a):
        x = jnp.concatenate([s, a], axis=-1)
        return jnp.maximum(x @ w1 + b1, 0.0) @ w2 + b2

    # 1) tiny batch, forced through the Pallas kernel, f32 operands (exact check).
    out = jax.block_until_ready(
        critic_forward(state, act, w1, b1, w2, b2,
                       matmul_dtype=jnp.float32, xla_fallback_batch=0))
    assert out.shape == (B, 1)
    assert jnp.allclose(out, ref_fn(state, act), atol=1e-4, rtol=1e-4)

    # 2) ragged batch, multiple grid steps, partial final block (no input padding).
    B2 = 300
    k_s2, k_a2 = jax.random.split(jax.random.PRNGKey(1))
    state2 = jax.random.normal(k_s2, (B2, STATE_DIM), jnp.float32)
    act2 = jax.random.normal(k_a2, (B2, ACT_DIM), jnp.float32)
    out2 = jax.block_until_ready(
        critic_forward(state2, act2, w1, b1, w2, b2, tile_b=128,
                       matmul_dtype=jnp.float32, xla_fallback_batch=0))
    assert out2.shape == (B2, 1)
    assert jnp.allclose(out2, ref_fn(state2, act2), atol=1e-4, rtol=1e-4)

    # 3) default bf16 matmul-operand path (f32 accumulation), looser tolerance.
    out_bf16 = jax.block_until_ready(
        critic_forward(state2, act2, w1, b1, w2, b2, tile_b=128,
                       xla_fallback_batch=0))
    assert jnp.allclose(out_bf16, ref_fn(state2, act2), atol=6e-2, rtol=6e-2)

    # 4) tiny-batch dispatch path (XLA fallback, default thresholds).
    out_small = jax.block_until_ready(critic_forward(state, act, w1, b1, w2, b2))
    assert jnp.allclose(out_small, ref_fn(state, act), atol=1e-4, rtol=1e-4)

    print("KERNEL_OK")
</pallas_src>

<mosaic_0001>
module attributes {stable_mosaic.version = 11 : i64} {
  func.func @_critic_kernel(%arg0: i32, %arg1: memref<8x22xf32, #tpu.memory_space<vmem>>, %arg2: memref<8x10xf32, #tpu.memory_space<vmem>>, %arg3: memref<22x128xf32, #tpu.memory_space<vmem>>, %arg4: memref<10x128xf32, #tpu.memory_space<vmem>>, %arg5: memref<1x128xf32, #tpu.memory_space<vmem>>, %arg6: memref<128x1xf32, #tpu.memory_space<vmem>>, %arg7: memref<8x1xf32, #tpu.memory_space<vmem>>) attributes {dimension_semantics = [#tpu.dimension_semantics<parallel>], iteration_bounds = array<i64: 1>, scalar_prefetch = 0 : i64, scratch_operands = 0 : i64, tpu.core_type = #tpu.core_type<tc>, window_params = [{transform_indices = @transform_0, window_bounds = array<i64: 8, 22>}, {transform_indices = @transform_1, window_bounds = array<i64: 8, 10>}, {pipeline_mode = #tpu.pipeline_mode<synchronous>, transform_indices = @transform_2, window_bounds = array<i64: 22, 128>}, {pipeline_mode = #tpu.pipeline_mode<synchronous>, transform_indices = @transform_3, window_bounds = array<i64: 10, 128>}, {pipeline_mode = #tpu.pipeline_mode<synchronous>, transform_indices = @transform_4, window_bounds = array<i64: 1, 128>}, {pipeline_mode = #tpu.pipeline_mode<synchronous>, transform_indices = @transform_5, window_bounds = array<i64: 128, 1>}, {transform_indices = @transform_6, window_bounds = array<i64: 8, 1>}]} {
    %c0 = arith.constant 0 : index
    %c0_0 = arith.constant 0 : index
    %0 = vector.load %arg1[%c0, %c0_0] : memref<8x22xf32, #tpu.memory_space<vmem>>, vector<8x22xf32>
    %c0_1 = arith.constant 0 : index
    %c0_2 = arith.constant 0 : index
    %1 = vector.load %arg2[%c0_1, %c0_2] : memref<8x10xf32, #tpu.memory_space<vmem>>, vector<8x10xf32>
    %c0_3 = arith.constant 0 : index
    %c0_4 = arith.constant 0 : index
    %2 = vector.load %arg3[%c0_3, %c0_4] : memref<22x128xf32, #tpu.memory_space<vmem>>, vector<22x128xf32>
    %cst = arith.constant dense<0.000000e+00> : vector<8x128xf32>
    %3 = tpu.matmul %0, %2, %cst {dimension_numbers = #tpu.dot_dimension_numbers<[1], [0], [0], [1], [0, 0, 1, 1], [], []>} : vector<8x22xf32>, vector<22x128xf32>, vector<8x128xf32> -> vector<8x128xf32>
    %c0_5 = arith.constant 0 : index
    %c0_6 = arith.constant 0 : index
    %4 = vector.load %arg4[%c0_5, %c0_6] : memref<10x128xf32, #tpu.memory_space<vmem>>, vector<10x128xf32>
    %cst_7 = arith.constant dense<0.000000e+00> : vector<8x128xf32>
    %5 = tpu.matmul %1, %4, %cst_7 {dimension_numbers = #tpu.dot_dimension_numbers<[1], [0], [0], [1], [0, 0, 1, 1], [], []>} : vector<8x10xf32>, vector<10x128xf32>, vector<8x128xf32> -> vector<8x128xf32>
    %6 = arith.addf %3, %5 : vector<8x128xf32>
    %c0_8 = arith.constant 0 : index
    %c0_9 = arith.constant 0 : index
    %7 = vector.load %arg5[%c0_8, %c0_9] : memref<1x128xf32, #tpu.memory_space<vmem>>, vector<1x128xf32>
    %8 = vector.broadcast %7 : vector<1x128xf32> to vector<8x128xf32>
    %9 = arith.addf %6, %8 : vector<8x128xf32>
    %cst_10 = arith.constant 0.000000e+00 : f32
    %10 = vector.broadcast %cst_10 : f32 to vector<8x128xf32>
    %11 = arith.maximumf %9, %10 : vector<8x128xf32>
    %c0_11 = arith.constant 0 : index
    %c0_12 = arith.constant 0 : index
    %12 = vector.load %arg6[%c0_11, %c0_12] : memref<128x1xf32, #tpu.memory_space<vmem>>, vector<128x1xf32>
    %cst_13 = arith.constant dense<0.000000e+00> : vector<8x1xf32>
    %13 = tpu.matmul %11, %12, %cst_13 {dimension_numbers = #tpu.dot_dimension_numbers<[1], [0], [0], [1], [0, 0, 1, 1], [], []>} : vector<8x128xf32>, vector<128x1xf32>, vector<8x1xf32> -> vector<8x1xf32>
    %c0_14 = arith.constant 0 : index
    %c0_15 = arith.constant 0 : index
    %14 = vector.load %arg7[%c0_14, %c0_15] : memref<8x1xf32, #tpu.memory_space<vmem>>, vector<8x1xf32>
    tpu.vector_store %arg7[%c0_14, %c0_15], %13 {strides = array<i32>} : memref<8x1xf32, #tpu.memory_space<vmem>>, vector<8x1xf32>,
    return
  }
  func.func @transform_0(%arg0: i32) -> (i32, i32) {
    %c0_i32 = arith.constant 0 : i32
    %c0_i32_0 = arith.constant 0 : i32
    return %arg0, %c0_i32 : i32, i32
  }
  func.func @transform_1(%arg0: i32) -> (i32, i32) {
    %c0_i32 = arith.constant 0 : i32
    %c0_i32_0 = arith.constant 0 : i32
    return %arg0, %c0_i32 : i32, i32
  }
  func.func @transform_2(%arg0: i32) -> (i32, i32) {
    %c0_i32 = arith.constant 0 : i32
    %c0_i32_0 = arith.constant 0 : i32
    %c0_i32_1 = arith.constant 0 : i32
    return %c0_i32, %c0_i32_0 : i32, i32
  }
  func.func @transform_3(%arg0: i32) -> (i32, i32) {
    %c0_i32 = arith.constant 0 : i32
    %c0_i32_0 = arith.constant 0 : i32
    %c0_i32_1 = arith.constant 0 : i32
    return %c0_i32, %c0_i32_0 : i32, i32
  }
  func.func @transform_4(%arg0: i32) -> (i32, i32) {
    %c0_i32 = arith.constant 0 : i32
    %c0_i32_0 = arith.constant 0 : i32
    %c0_i32_1 = arith.constant 0 : i32
    return %c0_i32, %c0_i32_0 : i32, i32
  }
  func.func @transform_5(%arg0: i32) -> (i32, i32) {
    %c0_i32 = arith.constant 0 : i32
    %c0_i32_0 = arith.constant 0 : i32
    %c0_i32_1 = arith.constant 0 : i32
    return %c0_i32, %c0_i32_0 : i32, i32
  }
  func.func @transform_6(%arg0: i32) -> (i32, i32) {
    %c0_i32 = arith.constant 0 : i32
    %c0_i32_0 = arith.constant 0 : i32
    return %arg0, %c0_i32 : i32, i32
  }
}

</mosaic_0001>

<llo_original>
// kernel: critic_forward.1
$region0: #{critic_forward.1}
  #allocation0 [shape = 'u32[]', space=smem, size = 0x4, offset = 0x4, fixed_abs, tag = 'smem constant byte address 0x4 - core index']
  #allocation1 [shape = 'u32[144,128]{1,0:T(1,128)}', space=vmem, size = 0x12000, scoped, tag = 'internal scratch']
  %s0 = inlined_call_operand.vmem [shape: f32[8,22], index: 0, kind: input, shape index: {}]
  %s1 = inlined_call_operand.vmem [shape: f32[8,10], index: 1, kind: input, shape index: {}]
  %s2 = inlined_call_operand.vmem [shape: f32[22,128], index: 2, kind: input, shape index: {}]
  %s3 = inlined_call_operand.vmem [shape: f32[10,128], index: 3, kind: input, shape index: {}]
  %s4 = inlined_call_operand.vmem [shape: f32[1,128], index: 4, kind: input, shape index: {}]
  %s5 = inlined_call_operand.vmem [shape: f32[128,1], index: 5, kind: input, shape index: {}]
  %s6 = inlined_call_operand.vmem [shape: f32[8,1], index: 6, kind: output, shape index: {}]
  %s7 = sld [smem:[#allocation0]]
  $region34: #{critic_forward.1} parent=0
    _
  %s9 = ssub.s32 1, %s7
  %s10 = scalar_select 0, %s9, %s7
  // Predicated region
  $region2: #{critic_forward.1} parent=0 // pred_check
    _
  $region3: #{critic_forward.1} parent=0 // pred_check_branch
    %12 = sbr.rel (0) target = $region5
  $region4: #{critic_forward.1} parent=0 // pred_region
    _
  $region5: #{critic_forward.1} parent=0 // pred_fallthru
    _
  // Predicated region
  $region6: #{critic_forward.1} parent=0 // pred_check
    _
  $region7: #{critic_forward.1} parent=0 // pred_check_branch
    %14 = sbr.rel (0) target = $region9
  $region8: #{critic_forward.1} parent=0 // pred_region
    _
  $region9: #{critic_forward.1} parent=0 // pred_fallthru
    _
  // Predicated region
  $region10: #{critic_forward.1} parent=0 // pred_check
    _
  $region11: #{critic_forward.1} parent=0 // pred_check_branch
    %16 = sbr.rel (0) target = $region13
  $region12: #{critic_forward.1} parent=0 // pred_region
    _
  $region13: #{critic_forward.1} parent=0 // pred_fallthru
    _
  // Predicated region
  $region14: #{critic_forward.1} parent=0 // pred_check
    _
  $region15: #{critic_forward.1} parent=0 // pred_check_branch
    %18 = sbr.rel (0) target = $region17
  $region16: #{critic_forward.1} parent=0 // pred_region
    _
  $region17: #{critic_forward.1} parent=0 // pred_fallthru
    _
  // Predicated region
  $region18: #{critic_forward.1} parent=0 // pred_check
    _
  $region19: #{critic_forward.1} parent=0 // pred_check_branch
    %20 = sbr.rel (0) target = $region21
  $region20: #{critic_forward.1} parent=0 // pred_region
    _
  $region21: #{critic_forward.1} parent=0 // pred_fallthru
    _
  // Predicated region
  $region22: #{critic_forward.1} parent=0 // pred_check
    _
  $region23: #{critic_forward.1} parent=0 // pred_check_branch
    %22 = sbr.rel (0) target = $region25
  $region24: #{critic_forward.1} parent=0 // pred_region
    _
  $region25: #{critic_forward.1} parent=0 // pred_fallthru
    _
  %v23 = vld [vmem:[%s0] sm:$0xff]
  %v24 = vld [vmem:[%s1] sm:$0xff]
  %v25 = vld [vmem:[%s2] sm:$0xff]
  %v26 = vld [vmem:[%s2 + $0x8] sm:$0xff]
  %v27 = vld [vmem:[%s2 + $0x10] sm:$0x3f]
  %v28 = vld [vmem:[%s3] sm:$0xff]
  %v29 = vld [vmem:[%s3 + $0x8] sm:$0x3]
  %vm30 = vcmask 80896
  %v32 = vsel %vm30, %v24, 0
  %vm34 = vcmask 1041408
  %v36 = vsel %vm34, %v29, 0
  %38 = vmatprep.subr.mxu0 0.0
  %39 = vmatpush1.msra.mxu0 0.0
  %40 = vmatprep.subr.mxu0 0.0
  %41 = vmatpush1.msra.mxu0 0.0
  %42 = vmatprep.subr.mxu0 0.0
  %43 = vmatpush1.msra.mxu0 0.0
  %44 = vmatprep.subr.mxu0 0.0
  %45 = vmatpush1.msra.mxu0 0.0
  %46 = vmatprep.subr.mxu0 0.0
  %47 = vmatpush1.msra.mxu0 0.0
  %48 = vmatprep.subr.mxu0 0.0
  %49 = vmatpush1.msra.mxu0 0.0
  %50 = vmatprep.subr.mxu0 0.0
  %51 = vmatpush1.msra.mxu0 0.0
  %52 = vmatprep.subr.mxu0 0.0
  %53 = vmatpush1.msra.mxu0 0.0
  %54 = vmatprep.subr.mxu0 0.0
  %55 = vmatpush1.msra.mxu0 0.0
  %56 = vmatprep.subr.mxu0 0.0
  %57 = vmatpush1.msra.mxu0 0.0
  %58 = vmatprep.subr.mxu0 0.0
  %59 = vmatpush1.msra.mxu0 0.0
  %60 = vmatprep.subr.mxu0 0.0
  %61 = vmatpush1.msra.mxu0 0.0
  %62 = vmatprep.subr.mxu0 0.0
  %63 = vmatpush1.msra.mxu0 0.0
  %64 = vmatprep.subr.mxu0 0.0
  %65 = vmatpush1.msra.mxu0 0.0
  %66 = vmatprep.subr.mxu0 0.0
  %67 = vmatpush1.msra.mxu0 %v36
  %68 = vmatprep.subr.mxu0 0.0
  %69 = vmatpush1.msra.mxu0 %v28
  %70 = vmatprep.subr.mxu0 0.0
  %71 = vmatpush2.msra.mxu0 0.0
  %72 = vmatprep.subr.mxu0 0.0
  %73 = vmatpush2.msra.mxu0 0.0
  %74 = vmatprep.subr.mxu0 0.0
  %75 = vmatpush2.msra.mxu0 0.0
  %76 = vmatprep.subr.mxu0 0.0
  %77 = vmatpush2.msra.mxu0 0.0
  %78 = vmatprep.subr.mxu0 0.0
  %79 = vmatpush2.msra.mxu0 0.0
  %80 = vmatprep.subr.mxu0 0.0
  %81 = vmatpush2.msra.mxu0 0.0
  %82 = vmatprep.subr.mxu0 0.0
  %83 = vmatpush2.msra.mxu0 0.0
  %84 = vmatprep.subr.mxu0 0.0
  %85 = vmatpush2.msra.mxu0 0.0
  %86 = vmatprep.subr.mxu0 0.0
  %87 = vmatpush2.msra.mxu0 0.0
  %88 = vmatprep.subr.mxu0 0.0
  %89 = vmatpush2.msra.mxu0 0.0
  %90 = vmatprep.subr.mxu0 0.0
  %91 = vmatpush2.msra.mxu0 0.0
  %92 = vmatprep.subr.mxu0 0.0
  %93 = vmatpush2.msra.mxu0 0.0
  %94 = vmatprep.subr.mxu0 0.0
  %95 = vmatpush2.msra.mxu0 0.0
  %96 = vmatprep.subr.mxu0 0.0
  %97 = vmatpush2.msra.mxu0 0.0
  %98 = vmatprep.subr.mxu0 0.0
  %99 = vmatpush2.msra.mxu0 0.0
  %100 = vmatprep.subr.mxu0 0.0
  %101 = vmatpush2.msra.mxu0 0.0
  %102 = vmatprep.mubr.f32.mxu0 0.0
  %103 = vmatmul.mubr.f32.gmra.mxu0 %v32
  %v104 = vpop.f32.mrf.mxu0
  %v105 = vadd.f32 0.0, %v104
  %v106 = vpop.f32.mrf.mxu0
  %107 = vdwg.mxu0
  %vm108 = vcmask 179200
  %v110 = vsel %vm108, %v23, 0
  %vm112 = vcmask 1045504
  %v114 = vsel %vm112, %v27, 0
  %116 = vmatprep.subr.mxu0 0.0
  %117 = vmatpush1.msra.mxu0 0.0
  %118 = vmatprep.subr.mxu0 0.0
  %119 = vmatpush1.msra.mxu0 0.0
  %120 = vmatprep.subr.mxu0 0.0
  %121 = vmatpush1.msra.mxu0 0.0
  %122 = vmatprep.subr.mxu0 0.0
  %123 = vmatpush1.msra.mxu0 0.0
  %124 = vmatprep.subr.mxu0 0.0
  %125 = vmatpush1.msra.mxu0 0.0
  %126 = vmatprep.subr.mxu0 0.0
  %127 = vmatpush1.msra.mxu0 0.0
  %128 = vmatprep.subr.mxu0 0.0
  %129 = vmatpush1.msra.mxu0 0.0
  %130 = vmatprep.subr.mxu0 0.0
  %131 = vmatpush1.msra.mxu0 0.0
  %132 = vmatprep.subr.mxu0 0.0
  %133 = vmatpush1.msra.mxu0 0.0
  %134 = vmatprep.subr.mxu0 0.0
  %135 = vmatpush1.msra.mxu0 0.0
  %136 = vmatprep.subr.mxu0 0.0
  %137 = vmatpush1.msra.mxu0 0.0
  %138 = vmatprep.subr.mxu0 0.0
  %139 = vmatpush1.msra.mxu0 0.0
  %140 = vmatprep.subr.mxu0 0.0
  %141 = vmatpush1.msra.mxu0 0.0
  %142 = vmatprep.subr.mxu0 0.0
  %143 = vmatpush1.msra.mxu0 %v114
  %144 = vmatprep.subr.mxu0 0.0
  %145 = vmatpush1.msra.mxu0 %v26
  %146 = vmatprep.subr.mxu0 0.0
  %147 = vmatpush1.msra.mxu0 %v25
  %148 = vmatprep.subr.mxu0 0.0
  %149 = vmatpush2.msra.mxu0 0.0
  %150 = vmatprep.subr.mxu0 0.0
  %151 = vmatpush2.msra.mxu0 0.0
  %152 = vmatprep.subr.mxu0 0.0
  %153 = vmatpush2.msra.mxu0 0.0
  %154 = vmatprep.subr.mxu0 0.0
  %155 = vmatpush2.msra.mxu0 0.0
  %156 = vmatprep.subr.mxu0 0.0
  %157 = vmatpush2.msra.mxu0 0.0
  %158 = vmatprep.subr.mxu0 0.0
  %159 = vmatpush2.msra.mxu0 0.0
  %160 = vmatprep.subr.mxu0 0.0
  %161 = vmatpush2.msra.mxu0 0.0
  %162 = vmatprep.subr.mxu0 0.0
  %163 = vmatpush2.msra.mxu0 0.0
  %164 = vmatprep.subr.mxu0 0.0
  %165 = vmatpush2.msra.mxu0 0.0
  %166 = vmatprep.subr.mxu0 0.0
  %167 = vmatpush2.msra.mxu0 0.0
  %168 = vmatprep.subr.mxu0 0.0
  %169 = vmatpush2.msra.mxu0 0.0
  %170 = vmatprep.subr.mxu0 0.0
  %171 = vmatpush2.msra.mxu0 0.0
  %172 = vmatprep.subr.mxu0 0.0
  %173 = vmatpush2.msra.mxu0 0.0
  %174 = vmatprep.subr.mxu0 0.0
  %175 = vmatpush2.msra.mxu0 0.0
  %176 = vmatprep.subr.mxu0 0.0
  %177 = vmatpush2.msra.mxu0 0.0
  %178 = vmatprep.subr.mxu0 0.0
  %179 = vmatpush2.msra.mxu0 0.0
  %180 = vmatprep.mubr.f32.mxu0 0.0
  %181 = vmatmul.mubr.f32.gmra.mxu0 %v110
  %v182 = vpop.f32.mrf.mxu0
  %v183 = vadd.f32 %v105, %v182
  %v184 = vpop.f32.mrf.mxu0
  %185 = vdwg.mxu0
  %v186 = vld [vmem:[%s4] sm:$0x1]
  %v188 = vlaneseq
  %v189 = vshrl.u32 %v188, 7
  %v190 = vsub.s32 0, %v189
  %v191 = vrot.slane %v186, %v190
  %v193 = vadd.f32 %v183, %v191
  %v194 = vmax.f32 %v193, 0.0
  %v195 = vld [vmem:[%s5] sm:$0xff]
  %v196 = vld [vmem:[%s5 + $0x8] sm:$0xff]
  %v197 = vld [vmem:[%s5 + $0x10] sm:$0xff]
  %v198 = vld [vmem:[%s5 + $0x18] sm:$0xff]
  %v199 = vld [vmem:[%s5 + $0x20] sm:$0xff]
  %v200 = vld [vmem:[%s5 + $0x28] sm:$0xff]
  %v201 = vld [vmem:[%s5 + $0x30] sm:$0xff]
  %v202 = vld [vmem:[%s5 + $0x38] sm:$0xff]
  %v203 = vld [vmem:[%s5 + $0x40] sm:$0xff]
  %v204 = vld [vmem:[%s5 + $0x48] sm:$0xff]
  %v205 = vld [vmem:[%s5 + $0x50] sm:$0xff]
  %v206 = vld [vmem:[%s5 + $0x58] sm:$0xff]
  %v207 = vld [vmem:[%s5 + $0x60] sm:$0xff]
  %v208 = vld [vmem:[%s5 + $0x68] sm:$0xff]
  %v209 = vld [vmem:[%s5 + $0x70] sm:$0xff]
  %v210 = vld [vmem:[%s5 + $0x78] sm:$0xff]
  %211 = vmatprep.subr.mxu0 0.0
  %212 = vmatpush1.msra.mxu0 %v210
  %213 = vmatprep.subr.mxu0 0.0
  %214 = vmatpush1.msra.mxu0 %v209
  %215 = vmatprep.subr.mxu0 0.0
  %216 = vmatpush1.msra.mxu0 %v208
  %217 = vmatprep.subr.mxu0 0.0
  %218 = vmatpush1.msra.mxu0 %v207
  %219 = vmatprep.subr.mxu0 0.0
  %220 = vmatpush1.msra.mxu0 %v206
  %221 = vmatprep.subr.mxu0 0.0
  %222 = vmatpush1.msra.mxu0 %v205
  %223 = vmatprep.subr.mxu0 0.0
  %224 = vmatpush1.msra.mxu0 %v204
  %225 = vmatprep.subr.mxu0 0.0
  %226 = vmatpush1.msra.mxu0 %v203
  %227 = vmatprep.subr.mxu0 0.0
  %228 = vmatpush1.msra.mxu0 %v202
  %229 = vmatprep.subr.mxu0 0.0
  %230 = vmatpush1.msra.mxu0 %v201
  %231 = vmatprep.subr.mxu0 0.0
  %232 = vmatpush1.msra.mxu0 %v200
  %233 = vmatprep.subr.mxu0 0.0
  %234 = vmatpush1.msra.mxu0 %v199
  %235 = vmatprep.subr.mxu0 0.0
  %236 = vmatpush1.msra.mxu0 %v198
  %237 = vmatprep.subr.mxu0 0.0
  %238 = vmatpush1.msra.mxu0 %v197
  %239 = vmatprep.subr.mxu0 0.0
  %240 = vmatpush1.msra.mxu0 %v196
  %241 = vmatprep.subr.mxu0 0.0
  %242 = vmatpush1.msra.mxu0 %v195
  %243 = vmatprep.subr.mxu0 0.0
  %244 = vmatpush2.msra.mxu0 0.0
  %245 = vmatprep.subr.mxu0 0.0
  %246 = vmatpush2.msra.mxu0 0.0
  %247 = vmatprep.subr.mxu0 0.0
  %248 = vmatpush2.msra.mxu0 0.0
  %249 = vmatprep.subr.mxu0 0.0
  %250 = vmatpush2.msra.mxu0 0.0
  %251 = vmatprep.subr.mxu0 0.0
  %252 = vmatpush2.msra.mxu0 0.0
  %253 = vmatprep.subr.mxu0 0.0
  %254 = vmatpush2.msra.mxu0 0.0
  %255 = vmatprep.subr.mxu0 0.0
  %256 = vmatpush2.msra.mxu0 0.0
  %257 = vmatprep.subr.mxu0 0.0
  %258 = vmatpush2.msra.mxu0 0.0
  %259 = vmatprep.subr.mxu0 0.0
  %260 = vmatpush2.msra.mxu0 0.0
  %261 = vmatprep.subr.mxu0 0.0
  %262 = vmatpush2.msra.mxu0 0.0
  %263 = vmatprep.subr.mxu0 0.0
  %264 = vmatpush2.msra.mxu0 0.0
  %265 = vmatprep.subr.mxu0 0.0
  %266 = vmatpush2.msra.mxu0 0.0
  %267 = vmatprep.subr.mxu0 0.0
  %268 = vmatpush2.msra.mxu0 0.0
  %269 = vmatprep.subr.mxu0 0.0
  %270 = vmatpush2.msra.mxu0 0.0
  %271 = vmatprep.subr.mxu0 0.0
  %272 = vmatpush2.msra.mxu0 0.0
  %273 = vmatprep.subr.mxu0 0.0
  %274 = vmatpush2.msra.mxu0 0.0
  %275 = vmatprep.mubr.f32.mxu0 0.0
  %276 = vmatmul.mubr.f32.gmra.mxu0 %v194
  %v277 = vpop.f32.mrf.mxu0
  %v278 = vadd.f32 0.0, %v277
  %v279 = vpop.f32.mrf.mxu0
  %280 = vdwg.mxu0
  %vm281 = vcmask 7168
  %282 = vst.msk [vmem:[%s6] sm:$0xff] %vm281, %v278
  // Predicated region
  $region26: #{critic_forward.1} parent=0 // pred_check
    _
  $region27: #{critic_forward.1} parent=0 // pred_check_branch
    %284 = sbr.rel (0) target = $region29
  $region28: #{critic_forward.1} parent=0 // pred_region
    _
  $region29: #{critic_forward.1} parent=0 // pred_fallthru
    _
  // Predicated region
  $region30: #{critic_forward.1} parent=0 // pred_check
    _
  $region31: #{critic_forward.1} parent=0 // pred_check_branch
    %286 = sbr.rel (0) target = $region33
  $region32: #{critic_forward.1} parent=0 // pred_region
    _
  $region33: #{critic_forward.1} parent=0 // pred_fallthru
    _

</llo_original>
